<compile_context>
chip_gen: v5e
topology: v5e:2x2
jax: 0.10.0
libtpu: 0.0.40
codegen_flags: <defaults>
</compile_context>

<pallas_src>
import functools

import jax
import jax.numpy as jnp
from jax.experimental import pallas as pl
from jax.experimental.pallas import tpu as pltpu


def _round_up(n: int, m: int) -> int:
    return ((n + m - 1) // m) * m


def fcnet_kernel(x_ref, w1_ref, b1_ref, w2_ref, b2_ref, w3_ref, b3_ref, o_ref):
    """One batch tile, feature-major.

    x_ref : (5, TB)   activations, batch on lanes
    wN_ref: (out, in) PyTorch-layout weights (VMEM-resident across the grid)
    bN_ref: (out, 1)  biases (column vectors -> lane-broadcast)
    o_ref : (4, TB)
    """

    def dense(h, w_ref, b_ref):
        # (out, TB) = W @ h + b, computed as unrolled VPU outer-product FMAs.
        out_f, in_f = w_ref.shape
        n = h.shape[1]
        w = w_ref[...]
        acc = jnp.broadcast_to(b_ref[...], (out_f, n))
        for k in range(in_f):  # static, fully unrolled (<= 12 iterations)
            # (out, 1) lane-broadcast  *  (1, TB) sublane-broadcast  -> VPU FMA
            acc = acc + w[:, k:k + 1] * h[k:k + 1, :]
        return acc

    x = x_ref[...]
    h1 = jnp.maximum(dense(x, w1_ref, b1_ref), 0.0)
    h2 = jnp.maximum(dense(h1, w2_ref, b2_ref), 0.0)
    o_ref[...] = dense(h2, w3_ref, b3_ref).astype(o_ref.dtype)


@functools.partial(jax.jit, static_argnames=("tb",))
def fcnet_forward(x, params, *, tb=1024):
    """x: (B, 5) float32 -> (B, 4) float32."""
    B, in_f = x.shape
    w1, b1 = params["w1"], params["b1"]
    w2, b2 = params["w2"], params["b2"]
    w3, b3 = params["w3"], params["b3"]
    out_f = w3.shape[0]

    # Batch tile: multiple of 128 (lane-dense), capped so tiny batches use one tile.
    tb = min(tb, _round_up(B, 128))
    b_pad = _round_up(B, tb)

    # Layout plumbing outside the kernel: feature-major, zero-pad ragged batch.
    xt = jnp.pad(x.T, ((0, 0), (0, b_pad - B)))  # (5, b_pad)

    grid = (b_pad // tb,)

    def const_spec(shape):
        # full-array block, same block every step -> stays resident in VMEM
        return pl.BlockSpec(shape, lambda i: (0, 0))

    out_fm = pl.pallas_call(
        fcnet_kernel,
        out_shape=jax.ShapeDtypeStruct((out_f, b_pad), x.dtype),
        grid=grid,
        in_specs=[
            pl.BlockSpec((in_f, tb), lambda i: (0, i)),   # x batch tile
            const_spec(w1.shape), const_spec(b1.shape),
            const_spec(w2.shape), const_spec(b2.shape),
            const_spec(w3.shape), const_spec(b3.shape),
        ],
        out_specs=pl.BlockSpec((out_f, tb), lambda i: (0, i)),
        compiler_params=pltpu.CompilerParams(
            dimension_semantics=("parallel",),
        ),
        cost_estimate=pl.CostEstimate(
            flops=2 * b_pad * (5 * 10 + 10 * 12 + 12 * 4),
            transcendentals=0,
            bytes_accessed=(in_f + out_f) * b_pad * x.dtype.itemsize,
        ),
    )(xt, w1, b1, w2, b2, w3, b3)

    # slice off batch padding, back to batch-major
    return out_fm[:, :B].T


def init_params(key):
    """Deterministic init matching nn.Linear: weight (out, in), bias (out, 1)."""
    keys = jax.random.split(key, 6)

    def linear_init(kw, kb, fan_in, fan_out):
        bound = 1.0 / (fan_in ** 0.5)
        w = jax.random.uniform(kw, (fan_out, fan_in), jnp.float32, -bound, bound)
        b = jax.random.uniform(kb, (fan_out, 1), jnp.float32, -bound, bound)
        return w, b

    w1, b1 = linear_init(keys[0], keys[1], 5, 10)
    w2, b2 = linear_init(keys[2], keys[3], 10, 12)
    w3, b3 = linear_init(keys[4], keys[5], 12, 4)
    return {"w1": w1, "b1": b1, "w2": w2, "b2": b2, "w3": w3, "b3": b3}


def fcnet_ref(x, params):
    """Pure-JAX reference (PyTorch semantics: x @ W.T + b)."""
    h = jnp.maximum(x @ params["w1"].T + params["b1"].T, 0.0)
    h = jnp.maximum(h @ params["w2"].T + params["b2"].T, 0.0)
    return h @ params["w3"].T + params["b3"].T


if __name__ == "__main__":
    key = jax.random.PRNGKey(0)
    k_x, k_x2, k_p = jax.random.split(key, 3)
    params = init_params(k_p)

    # small batch (exercises ragged-batch zero-padding, single grid step)
    x_small = jax.random.normal(k_x, (8, 5), jnp.float32)
    out_small = jax.block_until_ready(fcnet_forward(x_small, params))
    ref_small = fcnet_ref(x_small, params)
    assert out_small.shape == (8, 4), out_small.shape
    assert jnp.allclose(out_small, ref_small, atol=1e-5, rtol=1e-5), "mismatch (small batch)"

    # larger batch (exercises the multi-step pipelined grid: 2500 -> 3 tiles of 1024)
    x_big = jax.random.normal(k_x2, (2500, 5), jnp.float32)
    out_big = jax.block_until_ready(fcnet_forward(x_big, params))
    ref_big = fcnet_ref(x_big, params)
    assert out_big.shape == (2500, 4), out_big.shape
    assert jnp.allclose(out_big, ref_big, atol=1e-5, rtol=1e-5), "mismatch (large batch)"

    print("KERNEL_OK")
</pallas_src>

<mosaic_0001>
module attributes {stable_mosaic.version = 11 : i64} {
  func.func @fcnet_kernel(%arg0: i32, %arg1: memref<5x128xf32, #tpu.memory_space<vmem>>, %arg2: memref<10x5xf32, #tpu.memory_space<vmem>>, %arg3: memref<10x1xf32, #tpu.memory_space<vmem>>, %arg4: memref<12x10xf32, #tpu.memory_space<vmem>>, %arg5: memref<12x1xf32, #tpu.memory_space<vmem>>, %arg6: memref<4x12xf32, #tpu.memory_space<vmem>>, %arg7: memref<4x1xf32, #tpu.memory_space<vmem>>, %arg8: memref<4x128xf32, #tpu.memory_space<vmem>>) attributes {dimension_semantics = [#tpu.dimension_semantics<parallel>], iteration_bounds = array<i64: 1>, scalar_prefetch = 0 : i64, scratch_operands = 0 : i64, tpu.core_type = #tpu.core_type<tc>, window_params = [{transform_indices = @transform_0, window_bounds = array<i64: 5, 128>}, {pipeline_mode = #tpu.pipeline_mode<synchronous>, transform_indices = @transform_1, window_bounds = array<i64: 10, 5>}, {pipeline_mode = #tpu.pipeline_mode<synchronous>, transform_indices = @transform_2, window_bounds = array<i64: 10, 1>}, {pipeline_mode = #tpu.pipeline_mode<synchronous>, transform_indices = @transform_3, window_bounds = array<i64: 12, 10>}, {pipeline_mode = #tpu.pipeline_mode<synchronous>, transform_indices = @transform_4, window_bounds = array<i64: 12, 1>}, {pipeline_mode = #tpu.pipeline_mode<synchronous>, transform_indices = @transform_5, window_bounds = array<i64: 4, 12>}, {pipeline_mode = #tpu.pipeline_mode<synchronous>, transform_indices = @transform_6, window_bounds = array<i64: 4, 1>}, {transform_indices = @transform_7, window_bounds = array<i64: 4, 128>}]} {
    %c0 = arith.constant 0 : index
    %c0_0 = arith.constant 0 : index
    %0 = vector.load %arg1[%c0, %c0_0] : memref<5x128xf32, #tpu.memory_space<vmem>>, vector<5x128xf32>
    %c0_1 = arith.constant 0 : index
    %c0_2 = arith.constant 0 : index
    %1 = vector.load %arg2[%c0_1, %c0_2] : memref<10x5xf32, #tpu.memory_space<vmem>>, vector<10x5xf32>
    %c0_3 = arith.constant 0 : index
    %c0_4 = arith.constant 0 : index
    %2 = vector.load %arg3[%c0_3, %c0_4] : memref<10x1xf32, #tpu.memory_space<vmem>>, vector<10x1xf32>
    %3 = vector.shape_cast %2 : vector<10x1xf32> to vector<10x1xf32>
    %4 = vector.broadcast %3 : vector<10x1xf32> to vector<10x128xf32>
    %5 = vector.extract_strided_slice %1 {offsets = [0, 0], sizes = [10, 1], strides = [1, 1]} : vector<10x5xf32> to vector<10x1xf32>
    %6 = vector.extract_strided_slice %0 {offsets = [0, 0], sizes = [1, 128], strides = [1, 1]} : vector<5x128xf32> to vector<1x128xf32>
    %7 = vector.broadcast %5 : vector<10x1xf32> to vector<10x128xf32>
    %8 = vector.broadcast %6 : vector<1x128xf32> to vector<10x128xf32>
    %9 = arith.mulf %7, %8 : vector<10x128xf32>
    %10 = arith.addf %4, %9 : vector<10x128xf32>
    %11 = vector.extract_strided_slice %1 {offsets = [0, 1], sizes = [10, 1], strides = [1, 1]} : vector<10x5xf32> to vector<10x1xf32>
    %12 = vector.extract_strided_slice %0 {offsets = [1, 0], sizes = [1, 128], strides = [1, 1]} : vector<5x128xf32> to vector<1x128xf32>
    %13 = vector.broadcast %11 : vector<10x1xf32> to vector<10x128xf32>
    %14 = vector.broadcast %12 : vector<1x128xf32> to vector<10x128xf32>
    %15 = arith.mulf %13, %14 : vector<10x128xf32>
    %16 = arith.addf %10, %15 : vector<10x128xf32>
    %17 = vector.extract_strided_slice %1 {offsets = [0, 2], sizes = [10, 1], strides = [1, 1]} : vector<10x5xf32> to vector<10x1xf32>
    %18 = vector.extract_strided_slice %0 {offsets = [2, 0], sizes = [1, 128], strides = [1, 1]} : vector<5x128xf32> to vector<1x128xf32>
    %19 = vector.broadcast %17 : vector<10x1xf32> to vector<10x128xf32>
    %20 = vector.broadcast %18 : vector<1x128xf32> to vector<10x128xf32>
    %21 = arith.mulf %19, %20 : vector<10x128xf32>
    %22 = arith.addf %16, %21 : vector<10x128xf32>
    %23 = vector.extract_strided_slice %1 {offsets = [0, 3], sizes = [10, 1], strides = [1, 1]} : vector<10x5xf32> to vector<10x1xf32>
    %24 = vector.extract_strided_slice %0 {offsets = [3, 0], sizes = [1, 128], strides = [1, 1]} : vector<5x128xf32> to vector<1x128xf32>
    %25 = vector.broadcast %23 : vector<10x1xf32> to vector<10x128xf32>
    %26 = vector.broadcast %24 : vector<1x128xf32> to vector<10x128xf32>
    %27 = arith.mulf %25, %26 : vector<10x128xf32>
    %28 = arith.addf %22, %27 : vector<10x128xf32>
    %29 = vector.extract_strided_slice %1 {offsets = [0, 4], sizes = [10, 1], strides = [1, 1]} : vector<10x5xf32> to vector<10x1xf32>
    %30 = vector.extract_strided_slice %0 {offsets = [4, 0], sizes = [1, 128], strides = [1, 1]} : vector<5x128xf32> to vector<1x128xf32>
    %31 = vector.broadcast %29 : vector<10x1xf32> to vector<10x128xf32>
    %32 = vector.broadcast %30 : vector<1x128xf32> to vector<10x128xf32>
    %33 = arith.mulf %31, %32 : vector<10x128xf32>
    %34 = arith.addf %28, %33 : vector<10x128xf32>
    %cst = arith.constant 0.000000e+00 : f32
    %35 = vector.broadcast %cst : f32 to vector<10x128xf32>
    %36 = arith.maximumf %34, %35 : vector<10x128xf32>
    %c0_5 = arith.constant 0 : index
    %c0_6 = arith.constant 0 : index
    %37 = vector.load %arg4[%c0_5, %c0_6] : memref<12x10xf32, #tpu.memory_space<vmem>>, vector<12x10xf32>
    %c0_7 = arith.constant 0 : index
    %c0_8 = arith.constant 0 : index
    %38 = vector.load %arg5[%c0_7, %c0_8] : memref<12x1xf32, #tpu.memory_space<vmem>>, vector<12x1xf32>
    %39 = vector.shape_cast %38 : vector<12x1xf32> to vector<12x1xf32>
    %40 = vector.broadcast %39 : vector<12x1xf32> to vector<12x128xf32>
    %41 = vector.extract_strided_slice %37 {offsets = [0, 0], sizes = [12, 1], strides = [1, 1]} : vector<12x10xf32> to vector<12x1xf32>
    %42 = vector.extract_strided_slice %36 {offsets = [0, 0], sizes = [1, 128], strides = [1, 1]} : vector<10x128xf32> to vector<1x128xf32>
    %43 = vector.broadcast %41 : vector<12x1xf32> to vector<12x128xf32>
    %44 = vector.broadcast %42 : vector<1x128xf32> to vector<12x128xf32>
    %45 = arith.mulf %43, %44 : vector<12x128xf32>
    %46 = arith.addf %40, %45 : vector<12x128xf32>
    %47 = vector.extract_strided_slice %37 {offsets = [0, 1], sizes = [12, 1], strides = [1, 1]} : vector<12x10xf32> to vector<12x1xf32>
    %48 = vector.extract_strided_slice %36 {offsets = [1, 0], sizes = [1, 128], strides = [1, 1]} : vector<10x128xf32> to vector<1x128xf32>
    %49 = vector.broadcast %47 : vector<12x1xf32> to vector<12x128xf32>
    %50 = vector.broadcast %48 : vector<1x128xf32> to vector<12x128xf32>
    %51 = arith.mulf %49, %50 : vector<12x128xf32>
    %52 = arith.addf %46, %51 : vector<12x128xf32>
    %53 = vector.extract_strided_slice %37 {offsets = [0, 2], sizes = [12, 1], strides = [1, 1]} : vector<12x10xf32> to vector<12x1xf32>
    %54 = vector.extract_strided_slice %36 {offsets = [2, 0], sizes = [1, 128], strides = [1, 1]} : vector<10x128xf32> to vector<1x128xf32>
    %55 = vector.broadcast %53 : vector<12x1xf32> to vector<12x128xf32>
    %56 = vector.broadcast %54 : vector<1x128xf32> to vector<12x128xf32>
    %57 = arith.mulf %55, %56 : vector<12x128xf32>
    %58 = arith.addf %52, %57 : vector<12x128xf32>
    %59 = vector.extract_strided_slice %37 {offsets = [0, 3], sizes = [12, 1], strides = [1, 1]} : vector<12x10xf32> to vector<12x1xf32>
    %60 = vector.extract_strided_slice %36 {offsets = [3, 0], sizes = [1, 128], strides = [1, 1]} : vector<10x128xf32> to vector<1x128xf32>
    %61 = vector.broadcast %59 : vector<12x1xf32> to vector<12x128xf32>
    %62 = vector.broadcast %60 : vector<1x128xf32> to vector<12x128xf32>
    %63 = arith.mulf %61, %62 : vector<12x128xf32>
    %64 = arith.addf %58, %63 : vector<12x128xf32>
    %65 = vector.extract_strided_slice %37 {offsets = [0, 4], sizes = [12, 1], strides = [1, 1]} : vector<12x10xf32> to vector<12x1xf32>
    %66 = vector.extract_strided_slice %36 {offsets = [4, 0], sizes = [1, 128], strides = [1, 1]} : vector<10x128xf32> to vector<1x128xf32>
    %67 = vector.broadcast %65 : vector<12x1xf32> to vector<12x128xf32>
    %68 = vector.broadcast %66 : vector<1x128xf32> to vector<12x128xf32>
    %69 = arith.mulf %67, %68 : vector<12x128xf32>
    %70 = arith.addf %64, %69 : vector<12x128xf32>
    %71 = vector.extract_strided_slice %37 {offsets = [0, 5], sizes = [12, 1], strides = [1, 1]} : vector<12x10xf32> to vector<12x1xf32>
    %72 = vector.extract_strided_slice %36 {offsets = [5, 0], sizes = [1, 128], strides = [1, 1]} : vector<10x128xf32> to vector<1x128xf32>
    %73 = vector.broadcast %71 : vector<12x1xf32> to vector<12x128xf32>
    %74 = vector.broadcast %72 : vector<1x128xf32> to vector<12x128xf32>
    %75 = arith.mulf %73, %74 : vector<12x128xf32>
    %76 = arith.addf %70, %75 : vector<12x128xf32>
    %77 = vector.extract_strided_slice %37 {offsets = [0, 6], sizes = [12, 1], strides = [1, 1]} : vector<12x10xf32> to vector<12x1xf32>
    %78 = vector.extract_strided_slice %36 {offsets = [6, 0], sizes = [1, 128], strides = [1, 1]} : vector<10x128xf32> to vector<1x128xf32>
    %79 = vector.broadcast %77 : vector<12x1xf32> to vector<12x128xf32>
    %80 = vector.broadcast %78 : vector<1x128xf32> to vector<12x128xf32>
    %81 = arith.mulf %79, %80 : vector<12x128xf32>
    %82 = arith.addf %76, %81 : vector<12x128xf32>
    %83 = vector.extract_strided_slice %37 {offsets = [0, 7], sizes = [12, 1], strides = [1, 1]} : vector<12x10xf32> to vector<12x1xf32>
    %84 = vector.extract_strided_slice %36 {offsets = [7, 0], sizes = [1, 128], strides = [1, 1]} : vector<10x128xf32> to vector<1x128xf32>
    %85 = vector.broadcast %83 : vector<12x1xf32> to vector<12x128xf32>
    %86 = vector.broadcast %84 : vector<1x128xf32> to vector<12x128xf32>
    %87 = arith.mulf %85, %86 : vector<12x128xf32>
    %88 = arith.addf %82, %87 : vector<12x128xf32>
    %89 = vector.extract_strided_slice %37 {offsets = [0, 8], sizes = [12, 1], strides = [1, 1]} : vector<12x10xf32> to vector<12x1xf32>
    %90 = vector.extract_strided_slice %36 {offsets = [8, 0], sizes = [1, 128], strides = [1, 1]} : vector<10x128xf32> to vector<1x128xf32>
    %91 = vector.broadcast %89 : vector<12x1xf32> to vector<12x128xf32>
    %92 = vector.broadcast %90 : vector<1x128xf32> to vector<12x128xf32>
    %93 = arith.mulf %91, %92 : vector<12x128xf32>
    %94 = arith.addf %88, %93 : vector<12x128xf32>
    %95 = vector.extract_strided_slice %37 {offsets = [0, 9], sizes = [12, 1], strides = [1, 1]} : vector<12x10xf32> to vector<12x1xf32>
    %96 = vector.extract_strided_slice %36 {offsets = [9, 0], sizes = [1, 128], strides = [1, 1]} : vector<10x128xf32> to vector<1x128xf32>
    %97 = vector.broadcast %95 : vector<12x1xf32> to vector<12x128xf32>
    %98 = vector.broadcast %96 : vector<1x128xf32> to vector<12x128xf32>
    %99 = arith.mulf %97, %98 : vector<12x128xf32>
    %100 = arith.addf %94, %99 : vector<12x128xf32>
    %cst_9 = arith.constant 0.000000e+00 : f32
    %101 = vector.broadcast %cst_9 : f32 to vector<12x128xf32>
    %102 = arith.maximumf %100, %101 : vector<12x128xf32>
    %c0_10 = arith.constant 0 : index
    %c0_11 = arith.constant 0 : index
    %103 = vector.load %arg6[%c0_10, %c0_11] : memref<4x12xf32, #tpu.memory_space<vmem>>, vector<4x12xf32>
    %c0_12 = arith.constant 0 : index
    %c0_13 = arith.constant 0 : index
    %104 = vector.load %arg7[%c0_12, %c0_13] : memref<4x1xf32, #tpu.memory_space<vmem>>, vector<4x1xf32>
    %105 = vector.shape_cast %104 : vector<4x1xf32> to vector<4x1xf32>
    %106 = vector.broadcast %105 : vector<4x1xf32> to vector<4x128xf32>
    %107 = vector.extract_strided_slice %103 {offsets = [0, 0], sizes = [4, 1], strides = [1, 1]} : vector<4x12xf32> to vector<4x1xf32>
    %108 = vector.extract_strided_slice %102 {offsets = [0, 0], sizes = [1, 128], strides = [1, 1]} : vector<12x128xf32> to vector<1x128xf32>
    %109 = vector.broadcast %107 : vector<4x1xf32> to vector<4x128xf32>
    %110 = vector.broadcast %108 : vector<1x128xf32> to vector<4x128xf32>
    %111 = arith.mulf %109, %110 : vector<4x128xf32>
    %112 = arith.addf %106, %111 : vector<4x128xf32>
    %113 = vector.extract_strided_slice %103 {offsets = [0, 1], sizes = [4, 1], strides = [1, 1]} : vector<4x12xf32> to vector<4x1xf32>
    %114 = vector.extract_strided_slice %102 {offsets = [1, 0], sizes = [1, 128], strides = [1, 1]} : vector<12x128xf32> to vector<1x128xf32>
    %115 = vector.broadcast %113 : vector<4x1xf32> to vector<4x128xf32>
    %116 = vector.broadcast %114 : vector<1x128xf32> to vector<4x128xf32>
    %117 = arith.mulf %115, %116 : vector<4x128xf32>
    %118 = arith.addf %112, %117 : vector<4x128xf32>
    %119 = vector.extract_strided_slice %103 {offsets = [0, 2], sizes = [4, 1], strides = [1, 1]} : vector<4x12xf32> to vector<4x1xf32>
    %120 = vector.extract_strided_slice %102 {offsets = [2, 0], sizes = [1, 128], strides = [1, 1]} : vector<12x128xf32> to vector<1x128xf32>
    %121 = vector.broadcast %119 : vector<4x1xf32> to vector<4x128xf32>
    %122 = vector.broadcast %120 : vector<1x128xf32> to vector<4x128xf32>
    %123 = arith.mulf %121, %122 : vector<4x128xf32>
    %124 = arith.addf %118, %123 : vector<4x128xf32>
    %125 = vector.extract_strided_slice %103 {offsets = [0, 3], sizes = [4, 1], strides = [1, 1]} : vector<4x12xf32> to vector<4x1xf32>
    %126 = vector.extract_strided_slice %102 {offsets = [3, 0], sizes = [1, 128], strides = [1, 1]} : vector<12x128xf32> to vector<1x128xf32>
    %127 = vector.broadcast %125 : vector<4x1xf32> to vector<4x128xf32>
    %128 = vector.broadcast %126 : vector<1x128xf32> to vector<4x128xf32>
    %129 = arith.mulf %127, %128 : vector<4x128xf32>
    %130 = arith.addf %124, %129 : vector<4x128xf32>
    %131 = vector.extract_strided_slice %103 {offsets = [0, 4], sizes = [4, 1], strides = [1, 1]} : vector<4x12xf32> to vector<4x1xf32>
    %132 = vector.extract_strided_slice %102 {offsets = [4, 0], sizes = [1, 128], strides = [1, 1]} : vector<12x128xf32> to vector<1x128xf32>
    %133 = vector.broadcast %131 : vector<4x1xf32> to vector<4x128xf32>
    %134 = vector.broadcast %132 : vector<1x128xf32> to vector<4x128xf32>
    %135 = arith.mulf %133, %134 : vector<4x128xf32>
    %136 = arith.addf %130, %135 : vector<4x128xf32>
    %137 = vector.extract_strided_slice %103 {offsets = [0, 5], sizes = [4, 1], strides = [1, 1]} : vector<4x12xf32> to vector<4x1xf32>
    %138 = vector.extract_strided_slice %102 {offsets = [5, 0], sizes = [1, 128], strides = [1, 1]} : vector<12x128xf32> to vector<1x128xf32>
    %139 = vector.broadcast %137 : vector<4x1xf32> to vector<4x128xf32>
    %140 = vector.broadcast %138 : vector<1x128xf32> to vector<4x128xf32>
    %141 = arith.mulf %139, %140 : vector<4x128xf32>
    %142 = arith.addf %136, %141 : vector<4x128xf32>
    %143 = vector.extract_strided_slice %103 {offsets = [0, 6], sizes = [4, 1], strides = [1, 1]} : vector<4x12xf32> to vector<4x1xf32>
    %144 = vector.extract_strided_slice %102 {offsets = [6, 0], sizes = [1, 128], strides = [1, 1]} : vector<12x128xf32> to vector<1x128xf32>
    %145 = vector.broadcast %143 : vector<4x1xf32> to vector<4x128xf32>
    %146 = vector.broadcast %144 : vector<1x128xf32> to vector<4x128xf32>
    %147 = arith.mulf %145, %146 : vector<4x128xf32>
    %148 = arith.addf %142, %147 : vector<4x128xf32>
    %149 = vector.extract_strided_slice %103 {offsets = [0, 7], sizes = [4, 1], strides = [1, 1]} : vector<4x12xf32> to vector<4x1xf32>
    %150 = vector.extract_strided_slice %102 {offsets = [7, 0], sizes = [1, 128], strides = [1, 1]} : vector<12x128xf32> to vector<1x128xf32>
    %151 = vector.broadcast %149 : vector<4x1xf32> to vector<4x128xf32>
    %152 = vector.broadcast %150 : vector<1x128xf32> to vector<4x128xf32>
    %153 = arith.mulf %151, %152 : vector<4x128xf32>
    %154 = arith.addf %148, %153 : vector<4x128xf32>
    %155 = vector.extract_strided_slice %103 {offsets = [0, 8], sizes = [4, 1], strides = [1, 1]} : vector<4x12xf32> to vector<4x1xf32>
    %156 = vector.extract_strided_slice %102 {offsets = [8, 0], sizes = [1, 128], strides = [1, 1]} : vector<12x128xf32> to vector<1x128xf32>
    %157 = vector.broadcast %155 : vector<4x1xf32> to vector<4x128xf32>
    %158 = vector.broadcast %156 : vector<1x128xf32> to vector<4x128xf32>
    %159 = arith.mulf %157, %158 : vector<4x128xf32>
    %160 = arith.addf %154, %159 : vector<4x128xf32>
    %161 = vector.extract_strided_slice %103 {offsets = [0, 9], sizes = [4, 1], strides = [1, 1]} : vector<4x12xf32> to vector<4x1xf32>
    %162 = vector.extract_strided_slice %102 {offsets = [9, 0], sizes = [1, 128], strides = [1, 1]} : vector<12x128xf32> to vector<1x128xf32>
    %163 = vector.broadcast %161 : vector<4x1xf32> to vector<4x128xf32>
    %164 = vector.broadcast %162 : vector<1x128xf32> to vector<4x128xf32>
    %165 = arith.mulf %163, %164 : vector<4x128xf32>
    %166 = arith.addf %160, %165 : vector<4x128xf32>
    %167 = vector.extract_strided_slice %103 {offsets = [0, 10], sizes = [4, 1], strides = [1, 1]} : vector<4x12xf32> to vector<4x1xf32>
    %168 = vector.extract_strided_slice %102 {offsets = [10, 0], sizes = [1, 128], strides = [1, 1]} : vector<12x128xf32> to vector<1x128xf32>
    %169 = vector.broadcast %167 : vector<4x1xf32> to vector<4x128xf32>
    %170 = vector.broadcast %168 : vector<1x128xf32> to vector<4x128xf32>
    %171 = arith.mulf %169, %170 : vector<4x128xf32>
    %172 = arith.addf %166, %171 : vector<4x128xf32>
    %173 = vector.extract_strided_slice %103 {offsets = [0, 11], sizes = [4, 1], strides = [1, 1]} : vector<4x12xf32> to vector<4x1xf32>
    %174 = vector.extract_strided_slice %102 {offsets = [11, 0], sizes = [1, 128], strides = [1, 1]} : vector<12x128xf32> to vector<1x128xf32>
    %175 = vector.broadcast %173 : vector<4x1xf32> to vector<4x128xf32>
    %176 = vector.broadcast %174 : vector<1x128xf32> to vector<4x128xf32>
    %177 = arith.mulf %175, %176 : vector<4x128xf32>
    %178 = arith.addf %172, %177 : vector<4x128xf32>
    %c0_14 = arith.constant 0 : index
    %c0_15 = arith.constant 0 : index
    %179 = vector.load %arg8[%c0_14, %c0_15] : memref<4x128xf32, #tpu.memory_space<vmem>>, vector<4x128xf32>
    tpu.vector_store %arg8[%c0_14, %c0_15], %178 {strides = array<i32>} : memref<4x128xf32, #tpu.memory_space<vmem>>, vector<4x128xf32>,
    return
  }
  func.func @transform_0(%arg0: i32) -> (i32, i32) {
    %c0_i32 = arith.constant 0 : i32
    %c0_i32_0 = arith.constant 0 : i32
    return %c0_i32, %arg0 : i32, i32
  }
  func.func @transform_1(%arg0: i32) -> (i32, i32) {
    %c0_i32 = arith.constant 0 : i32
    %c0_i32_0 = arith.constant 0 : i32
    %c0_i32_1 = arith.constant 0 : i32
    return %c0_i32, %c0_i32_0 : i32, i32
  }
  func.func @transform_2(%arg0: i32) -> (i32, i32) {
    %c0_i32 = arith.constant 0 : i32
    %c0_i32_0 = arith.constant 0 : i32
    %c0_i32_1 = arith.constant 0 : i32
    return %c0_i32, %c0_i32_0 : i32, i32
  }
  func.func @transform_3(%arg0: i32) -> (i32, i32) {
    %c0_i32 = arith.constant 0 : i32
    %c0_i32_0 = arith.constant 0 : i32
    %c0_i32_1 = arith.constant 0 : i32
    return %c0_i32, %c0_i32_0 : i32, i32
  }
  func.func @transform_4(%arg0: i32) -> (i32, i32) {
    %c0_i32 = arith.constant 0 : i32
    %c0_i32_0 = arith.constant 0 : i32
    %c0_i32_1 = arith.constant 0 : i32
    return %c0_i32, %c0_i32_0 : i32, i32
  }
  func.func @transform_5(%arg0: i32) -> (i32, i32) {
    %c0_i32 = arith.constant 0 : i32
    %c0_i32_0 = arith.constant 0 : i32
    %c0_i32_1 = arith.constant 0 : i32
    return %c0_i32, %c0_i32_0 : i32, i32
  }
  func.func @transform_6(%arg0: i32) -> (i32, i32) {
    %c0_i32 = arith.constant 0 : i32
    %c0_i32_0 = arith.constant 0 : i32
    %c0_i32_1 = arith.constant 0 : i32
    return %c0_i32, %c0_i32_0 : i32, i32
  }
  func.func @transform_7(%arg0: i32) -> (i32, i32) {
    %c0_i32 = arith.constant 0 : i32
    %c0_i32_0 = arith.constant 0 : i32
    return %c0_i32, %arg0 : i32, i32
  }
}

</mosaic_0001>

<llo_original>
// kernel: fcnet_forward.1
$region0: #{fcnet_forward.1}
  #allocation0 [shape = 'u32[]', space=smem, size = 0x4, offset = 0x4, fixed_abs, tag = 'smem constant byte address 0x4 - core index']
  #allocation1 [shape = 'u32[72,128]{1,0:T(1,128)}', space=vmem, size = 0x9000, scoped, tag = 'internal scratch']
  %s0 = inlined_call_operand.vmem [shape: f32[5,128], index: 0, kind: input, shape index: {}]
  %s1 = inlined_call_operand.vmem [shape: f32[10,5], index: 1, kind: input, shape index: {}]
  %s2 = inlined_call_operand.vmem [shape: f32[10,1], index: 2, kind: input, shape index: {}]
  %s3 = inlined_call_operand.vmem [shape: f32[12,10], index: 3, kind: input, shape index: {}]
  %s4 = inlined_call_operand.vmem [shape: f32[12,1], index: 4, kind: input, shape index: {}]
  %s5 = inlined_call_operand.vmem [shape: f32[4,12], index: 5, kind: input, shape index: {}]
  %s6 = inlined_call_operand.vmem [shape: f32[4,1], index: 6, kind: input, shape index: {}]
  %s7 = inlined_call_operand.vmem [shape: f32[4,128], index: 7, kind: output, shape index: {}]
  %s8 = sld [smem:[#allocation0]]
  $region38: #{fcnet_forward.1} parent=0
    _
  %s10 = ssub.s32 1, %s8
  %s11 = scalar_select 0, %s10, %s8
  // Predicated region
  $region2: #{fcnet_forward.1} parent=0 // pred_check
    _
  $region3: #{fcnet_forward.1} parent=0 // pred_check_branch
    %13 = sbr.rel (0) target = $region5
  $region4: #{fcnet_forward.1} parent=0 // pred_region
    _
  $region5: #{fcnet_forward.1} parent=0 // pred_fallthru
    _
  // Predicated region
  $region6: #{fcnet_forward.1} parent=0 // pred_check
    _
  $region7: #{fcnet_forward.1} parent=0 // pred_check_branch
    %15 = sbr.rel (0) target = $region9
  $region8: #{fcnet_forward.1} parent=0 // pred_region
    _
  $region9: #{fcnet_forward.1} parent=0 // pred_fallthru
    _
  // Predicated region
  $region10: #{fcnet_forward.1} parent=0 // pred_check
    _
  $region11: #{fcnet_forward.1} parent=0 // pred_check_branch
    %17 = sbr.rel (0) target = $region13
  $region12: #{fcnet_forward.1} parent=0 // pred_region
    _
  $region13: #{fcnet_forward.1} parent=0 // pred_fallthru
    _
  // Predicated region
  $region14: #{fcnet_forward.1} parent=0 // pred_check
    _
  $region15: #{fcnet_forward.1} parent=0 // pred_check_branch
    %19 = sbr.rel (0) target = $region17
  $region16: #{fcnet_forward.1} parent=0 // pred_region
    _
  $region17: #{fcnet_forward.1} parent=0 // pred_fallthru
    _
  // Predicated region
  $region18: #{fcnet_forward.1} parent=0 // pred_check
    _
  $region19: #{fcnet_forward.1} parent=0 // pred_check_branch
    %21 = sbr.rel (0) target = $region21
  $region20: #{fcnet_forward.1} parent=0 // pred_region
    _
  $region21: #{fcnet_forward.1} parent=0 // pred_fallthru
    _
  // Predicated region
  $region22: #{fcnet_forward.1} parent=0 // pred_check
    _
  $region23: #{fcnet_forward.1} parent=0 // pred_check_branch
    %23 = sbr.rel (0) target = $region25
  $region24: #{fcnet_forward.1} parent=0 // pred_region
    _
  $region25: #{fcnet_forward.1} parent=0 // pred_fallthru
    _
  // Predicated region
  $region26: #{fcnet_forward.1} parent=0 // pred_check
    _
  $region27: #{fcnet_forward.1} parent=0 // pred_check_branch
    %25 = sbr.rel (0) target = $region29
  $region28: #{fcnet_forward.1} parent=0 // pred_region
    _
  $region29: #{fcnet_forward.1} parent=0 // pred_fallthru
    _
  %v26 = vld [vmem:[%s0] sm:$0x1f]
  %v27 = vld [vmem:[%s1] sm:$0xff]
  %v28 = vld [vmem:[%s1 + $0x8] sm:$0x3]
  %v29 = vld [vmem:[%s2] sm:$0xff]
  %v30 = vld [vmem:[%s2 + $0x8] sm:$0x3]
  %32 = vset.pattern.permute.xlu0 0
  %33 = vperm.xlu0 %32, %v29
  %v34 = vpop.permute.xlu0 %33
  %37 = vset.pattern.permute.xlu0 0
  %38 = vperm.xlu0 %37, %v30
  %v39 = vpop.permute.xlu0 %38
  %42 = vset.pattern.permute.xlu0 0
  %43 = vperm.xlu0 %42, %v27
  %v44 = vpop.permute.xlu0 %43
  %47 = vset.pattern.permute.xlu0 0
  %48 = vperm.xlu0 %47, %v28
  %v49 = vpop.permute.xlu0 %48
  %v51 = vperm.slane %v26, 0
  %v52 = vmul.f32 %v44, %v51
  %v53 = vmul.f32 %v49, %v51
  %v54 = vadd.f32 %v34, %v52
  %v55 = vadd.f32 %v39, %v53
  %56 = vset.pattern.permute.xlu0 1
  %57 = vperm.xlu0 %56, %v27
  %v58 = vpop.permute.xlu0 %57
  %60 = vset.pattern.permute.xlu0 1
  %61 = vperm.xlu0 %60, %v28
  %v62 = vpop.permute.xlu0 %61
  %v64 = vperm.slane %v26, 1
  %v65 = vmul.f32 %v58, %v64
  %v66 = vmul.f32 %v62, %v64
  %v67 = vadd.f32 %v54, %v65
  %v68 = vadd.f32 %v55, %v66
  %69 = vset.pattern.permute.xlu0 2
  %70 = vperm.xlu0 %69, %v27
  %v71 = vpop.permute.xlu0 %70
  %73 = vset.pattern.permute.xlu0 2
  %74 = vperm.xlu0 %73, %v28
  %v75 = vpop.permute.xlu0 %74
  %v77 = vperm.slane %v26, 2
  %v78 = vmul.f32 %v71, %v77
  %v79 = vmul.f32 %v75, %v77
  %v80 = vadd.f32 %v67, %v78
  %v81 = vadd.f32 %v68, %v79
  %82 = vset.pattern.permute.xlu0 3
  %83 = vperm.xlu0 %82, %v27
  %v84 = vpop.permute.xlu0 %83
  %86 = vset.pattern.permute.xlu0 3
  %87 = vperm.xlu0 %86, %v28
  %v88 = vpop.permute.xlu0 %87
  %v90 = vperm.slane %v26, 3
  %v91 = vmul.f32 %v84, %v90
  %v92 = vmul.f32 %v88, %v90
  %v93 = vadd.f32 %v80, %v91
  %v94 = vadd.f32 %v81, %v92
  %95 = vset.pattern.permute.xlu0 4
  %96 = vperm.xlu0 %95, %v27
  %v97 = vpop.permute.xlu0 %96
  %99 = vset.pattern.permute.xlu0 4
  %100 = vperm.xlu0 %99, %v28
  %v101 = vpop.permute.xlu0 %100
  %v103 = vperm.slane %v26, 4
  %v104 = vmul.f32 %v97, %v103
  %v105 = vmul.f32 %v101, %v103
  %v106 = vadd.f32 %v93, %v104
  %v107 = vadd.f32 %v94, %v105
  %v108 = vmax.f32 %v106, 0.0
  %v109 = vmax.f32 %v107, 0.0
  %v110 = vld [vmem:[%s3] sm:$0xff]
  %v111 = vld [vmem:[%s3 + $0x8] sm:$0xf]
  %v112 = vld [vmem:[%s4] sm:$0xff]
  %v113 = vld [vmem:[%s4 + $0x8] sm:$0xf]
  %115 = vset.pattern.permute.xlu0 0
  %116 = vperm.xlu0 %115, %v112
  %v117 = vpop.permute.xlu0 %116
  %120 = vset.pattern.permute.xlu0 0
  %121 = vperm.xlu0 %120, %v113
  %v122 = vpop.permute.xlu0 %121
  %125 = vset.pattern.permute.xlu0 0
  %126 = vperm.xlu0 %125, %v110
  %v127 = vpop.permute.xlu0 %126
  %130 = vset.pattern.permute.xlu0 0
  %131 = vperm.xlu0 %130, %v111
  %v132 = vpop.permute.xlu0 %131
  %v134 = vperm.slane %v108, 0
  %v135 = vmul.f32 %v127, %v134
  %v136 = vmul.f32 %v132, %v134
  %v137 = vadd.f32 %v117, %v135
  %v138 = vadd.f32 %v122, %v136
  %139 = vset.pattern.permute.xlu0 1
  %140 = vperm.xlu0 %139, %v110
  %v141 = vpop.permute.xlu0 %140
  %143 = vset.pattern.permute.xlu0 1
  %144 = vperm.xlu0 %143, %v111
  %v145 = vpop.permute.xlu0 %144
  %v147 = vperm.slane %v108, 1
  %v148 = vmul.f32 %v141, %v147
  %v149 = vmul.f32 %v145, %v147
  %v150 = vadd.f32 %v137, %v148
  %v151 = vadd.f32 %v138, %v149
  %152 = vset.pattern.permute.xlu0 2
  %153 = vperm.xlu0 %152, %v110
  %v154 = vpop.permute.xlu0 %153
  %156 = vset.pattern.permute.xlu0 2
  %157 = vperm.xlu0 %156, %v111
  %v158 = vpop.permute.xlu0 %157
  %v160 = vperm.slane %v108, 2
  %v161 = vmul.f32 %v154, %v160
  %v162 = vmul.f32 %v158, %v160
  %v163 = vadd.f32 %v150, %v161
  %v164 = vadd.f32 %v151, %v162
  %165 = vset.pattern.permute.xlu0 3
  %166 = vperm.xlu0 %165, %v110
  %v167 = vpop.permute.xlu0 %166
  %169 = vset.pattern.permute.xlu0 3
  %170 = vperm.xlu0 %169, %v111
  %v171 = vpop.permute.xlu0 %170
  %v173 = vperm.slane %v108, 3
  %v174 = vmul.f32 %v167, %v173
  %v175 = vmul.f32 %v171, %v173
  %v176 = vadd.f32 %v163, %v174
  %v177 = vadd.f32 %v164, %v175
  %178 = vset.pattern.permute.xlu0 4
  %179 = vperm.xlu0 %178, %v110
  %v180 = vpop.permute.xlu0 %179
  %182 = vset.pattern.permute.xlu0 4
  %183 = vperm.xlu0 %182, %v111
  %v184 = vpop.permute.xlu0 %183
  %v186 = vperm.slane %v108, 4
  %v187 = vmul.f32 %v180, %v186
  %v188 = vmul.f32 %v184, %v186
  %v189 = vadd.f32 %v176, %v187
  %v190 = vadd.f32 %v177, %v188
  %191 = vset.pattern.permute.xlu0 5
  %192 = vperm.xlu0 %191, %v110
  %v193 = vpop.permute.xlu0 %192
  %195 = vset.pattern.permute.xlu0 5
  %196 = vperm.xlu0 %195, %v111
  %v197 = vpop.permute.xlu0 %196
  %v199 = vperm.slane %v108, 5
  %v200 = vmul.f32 %v193, %v199
  %v201 = vmul.f32 %v197, %v199
  %v202 = vadd.f32 %v189, %v200
  %v203 = vadd.f32 %v190, %v201
  %204 = vset.pattern.permute.xlu0 6
  %205 = vperm.xlu0 %204, %v110
  %v206 = vpop.permute.xlu0 %205
  %208 = vset.pattern.permute.xlu0 6
  %209 = vperm.xlu0 %208, %v111
  %v210 = vpop.permute.xlu0 %209
  %v212 = vperm.slane %v108, 6
  %v213 = vmul.f32 %v206, %v212
  %v214 = vmul.f32 %v210, %v212
  %v215 = vadd.f32 %v202, %v213
  %v216 = vadd.f32 %v203, %v214
  %217 = vset.pattern.permute.xlu0 7
  %218 = vperm.xlu0 %217, %v110
  %v219 = vpop.permute.xlu0 %218
  %221 = vset.pattern.permute.xlu0 7
  %222 = vperm.xlu0 %221, %v111
  %v223 = vpop.permute.xlu0 %222
  %v225 = vperm.slane %v108, 7
  %v226 = vmul.f32 %v219, %v225
  %v227 = vmul.f32 %v223, %v225
  %v228 = vadd.f32 %v215, %v226
  %v229 = vadd.f32 %v216, %v227
  %230 = vset.pattern.permute.xlu0 8
  %231 = vperm.xlu0 %230, %v110
  %v232 = vpop.permute.xlu0 %231
  %234 = vset.pattern.permute.xlu0 8
  %235 = vperm.xlu0 %234, %v111
  %v236 = vpop.permute.xlu0 %235
  %v238 = vperm.slane %v109, 0
  %v239 = vmul.f32 %v232, %v238
  %v240 = vmul.f32 %v236, %v238
  %v241 = vadd.f32 %v228, %v239
  %v242 = vadd.f32 %v229, %v240
  %243 = vset.pattern.permute.xlu0 9
  %244 = vperm.xlu0 %243, %v110
  %v245 = vpop.permute.xlu0 %244
  %247 = vset.pattern.permute.xlu0 9
  %248 = vperm.xlu0 %247, %v111
  %v249 = vpop.permute.xlu0 %248
  %v251 = vperm.slane %v109, 1
  %v252 = vmul.f32 %v245, %v251
  %v253 = vmul.f32 %v249, %v251
  %v254 = vadd.f32 %v241, %v252
  %v255 = vadd.f32 %v242, %v253
  %v256 = vmax.f32 %v254, 0.0
  %v257 = vmax.f32 %v255, 0.0
  %v258 = vld [vmem:[%s5] sm:$0xf]
  %v259 = vld [vmem:[%s6] sm:$0xf]
  %261 = vset.pattern.permute.xlu0 0
  %262 = vperm.xlu0 %261, %v259
  %v263 = vpop.permute.xlu0 %262
  %266 = vset.pattern.permute.xlu0 0
  %267 = vperm.xlu0 %266, %v258
  %v268 = vpop.permute.xlu0 %267
  %v270 = vperm.slane %v256, 0
  %v271 = vmul.f32 %v268, %v270
  %v272 = vadd.f32 %v263, %v271
  %273 = vset.pattern.permute.xlu0 1
  %274 = vperm.xlu0 %273, %v258
  %v275 = vpop.permute.xlu0 %274
  %v277 = vperm.slane %v256, 1
  %v278 = vmul.f32 %v275, %v277
  %v279 = vadd.f32 %v272, %v278
  %280 = vset.pattern.permute.xlu0 2
  %281 = vperm.xlu0 %280, %v258
  %v282 = vpop.permute.xlu0 %281
  %v284 = vperm.slane %v256, 2
  %v285 = vmul.f32 %v282, %v284
  %v286 = vadd.f32 %v279, %v285
  %287 = vset.pattern.permute.xlu0 3
  %288 = vperm.xlu0 %287, %v258
  %v289 = vpop.permute.xlu0 %288
  %v291 = vperm.slane %v256, 3
  %v292 = vmul.f32 %v289, %v291
  %v293 = vadd.f32 %v286, %v292
  %294 = vset.pattern.permute.xlu0 4
  %295 = vperm.xlu0 %294, %v258
  %v296 = vpop.permute.xlu0 %295
  %v298 = vperm.slane %v256, 4
  %v299 = vmul.f32 %v296, %v298
  %v300 = vadd.f32 %v293, %v299
  %301 = vset.pattern.permute.xlu0 5
  %302 = vperm.xlu0 %301, %v258
  %v303 = vpop.permute.xlu0 %302
  %v305 = vperm.slane %v256, 5
  %v306 = vmul.f32 %v303, %v305
  %v307 = vadd.f32 %v300, %v306
  %308 = vset.pattern.permute.xlu0 6
  %309 = vperm.xlu0 %308, %v258
  %v310 = vpop.permute.xlu0 %309
  %v312 = vperm.slane %v256, 6
  %v313 = vmul.f32 %v310, %v312
  %v314 = vadd.f32 %v307, %v313
  %315 = vset.pattern.permute.xlu0 7
  %316 = vperm.xlu0 %315, %v258
  %v317 = vpop.permute.xlu0 %316
  %v319 = vperm.slane %v256, 7
  %v320 = vmul.f32 %v317, %v319
  %v321 = vadd.f32 %v314, %v320
  %322 = vset.pattern.permute.xlu0 8
  %323 = vperm.xlu0 %322, %v258
  %v324 = vpop.permute.xlu0 %323
  %v326 = vperm.slane %v257, 0
  %v327 = vmul.f32 %v324, %v326
  %v328 = vadd.f32 %v321, %v327
  %329 = vset.pattern.permute.xlu0 9
  %330 = vperm.xlu0 %329, %v258
  %v331 = vpop.permute.xlu0 %330
  %v333 = vperm.slane %v257, 1
  %v334 = vmul.f32 %v331, %v333
  %v335 = vadd.f32 %v328, %v334
  %336 = vset.pattern.permute.xlu0 10
  %337 = vperm.xlu0 %336, %v258
  %v338 = vpop.permute.xlu0 %337
  %v340 = vperm.slane %v257, 2
  %v341 = vmul.f32 %v338, %v340
  %v342 = vadd.f32 %v335, %v341
  %343 = vset.pattern.permute.xlu0 11
  %344 = vperm.xlu0 %343, %v258
  %v345 = vpop.permute.xlu0 %344
  %v347 = vperm.slane %v257, 3
  %v348 = vmul.f32 %v345, %v347
  %v349 = vadd.f32 %v342, %v348
  %350 = vst [vmem:[%s7] sm:$0xf] %v349
  // Predicated region
  $region30: #{fcnet_forward.1} parent=0 // pred_check
    _
  $region31: #{fcnet_forward.1} parent=0 // pred_check_branch
    %352 = sbr.rel (0) target = $region33
  $region32: #{fcnet_forward.1} parent=0 // pred_region
    _
  $region33: #{fcnet_forward.1} parent=0 // pred_fallthru
    _
  // Predicated region
  $region34: #{fcnet_forward.1} parent=0 // pred_check
    _
  $region35: #{fcnet_forward.1} parent=0 // pred_check_branch
    %354 = sbr.rel (0) target = $region37
  $region36: #{fcnet_forward.1} parent=0 // pred_region
    _
  $region37: #{fcnet_forward.1} parent=0 // pred_fallthru
    _

</llo_original>
